<compile_context>
chip_gen: v7x
topology: tpu7x:2x2x1
jax: 0.10.0
libtpu: 0.0.40
codegen_flags: <defaults>
</compile_context>

<pallas_src>
import functools

import jax
import jax.numpy as jnp
from jax import lax
from jax.experimental import pallas as pl
from jax.experimental.pallas import tpu as pltpu

LANE = 128
_SUBLANE = 8


def _round_up(x, m):
    return (x + m - 1) // m * m


def _pow_int(x, n: int):
    """x**n (n >= 1) via square-and-multiply: short VALU dependency chain."""
    acc = None
    while n > 0:
        if n & 1:
            acc = x if acc is None else acc * x
        n >>= 1
        if n > 0:
            x = x * x
    return acc


def _bce(p, t, logits: bool):
    if logits:
        # F.binary_cross_entropy_with_logits(reduction='none')
        return jnp.maximum(p, 0.0) - p * t + jnp.log1p(jnp.exp(-jnp.abs(p)))
    # F.binary_cross_entropy(reduction='none'); PyTorch clamps log at -100.
    log_p = jnp.maximum(jnp.log(p), -100.0)
    log_1mp = jnp.maximum(jnp.log(1.0 - p), -100.0)
    return -(t * log_p + (1.0 - t) * log_1mp)


def _focal_from_bce(bce, alpha: float, gamma: float):
    # gamma specialised at trace time: integer gammas avoid pow on the EUP.
    if gamma == 0.0:
        focal = bce
    else:
        one_minus_pt = 1.0 - jnp.exp(-bce)
        gi = int(gamma)
        if float(gi) == float(gamma) and gi >= 1:
            w = _pow_int(one_minus_pt, gi)
        else:
            w = one_minus_pt ** gamma
        focal = w * bce
    if alpha != 1.0:
        focal = alpha * focal
    return focal


@functools.lru_cache(maxsize=1)
def _num_tensorcores() -> int:
    """Best-effort TensorCore-per-chip count (2 on v7x, 1 on v5e/v6e)."""
    try:
        info = pltpu.get_tpu_info()
        for name in ("num_cores", "core_count", "num_tensorcores",
                     "tensorcore_count", "num_tensor_cores", "cores_per_chip"):
            v = getattr(info, name, None)
            if isinstance(v, int) and 1 <= v <= 8:
                return v
    except Exception:
        pass
    try:
        v = getattr(jax.devices()[0], "num_cores", None)
        if isinstance(v, int) and 1 <= v <= 8:
            return v
    except Exception:
        pass
    return 1  # conservative: no cross-core split


def _focal_sum_kernel(x_ref, t_ref, o_ref, acc_ref, *,
                      alpha, gamma, logits, rows, tile_rows, tiles_per_core,
                      acc_rows):
    c = pl.program_id(0)   # core-split axis ("parallel")
    i = pl.program_id(1)   # sequential reduction axis ("arbitrary")

    @pl.when(i == 0)
    def _():
        acc_ref[...] = jnp.zeros_like(acc_ref)

    # Tiles arrive in their native dtype; upcast on-chip.
    p = x_ref[...].astype(jnp.float32)
    t = t_ref[...].astype(jnp.float32)
    focal = _focal_from_bce(_bce(p, t, logits), alpha, gamma)

    def _accumulate(vals):
        if acc_rows == _SUBLANE:
            # (tr,128) -> (tr/8,8,128) is a free vreg relabeling, so the
            # reduce is pure per-vreg VALU adds (no cross-sublane XLU work).
            acc_ref[...] += vals.reshape(tile_rows // _SUBLANE, _SUBLANE,
                                         LANE).sum(axis=0)
        else:
            acc_ref[...] += jnp.sum(vals, axis=0, keepdims=True)

    # Row-based bound (not a flat element index): no int32 overflow even for
    # multi-billion-element inputs.
    rows_left = rows - (c * tiles_per_core + i) * tile_rows

    @pl.when(rows_left >= tile_rows)        # full tile: no mask work at all
    def _():
        _accumulate(focal)

    @pl.when(rows_left < tile_rows)         # boundary / phantom tile only
    def _():
        row_ids = lax.broadcasted_iota(jnp.int32, (tile_rows, LANE), 0)
        # Garbage from a clipped/clamped DMA only sits in the unselected
        # branch of the select, so NaN/Inf never propagate.
        _accumulate(jnp.where(row_ids < rows_left, focal, 0.0))

    @pl.when(i == pl.num_programs(1) - 1)
    def _():
        o_ref[0] = acc_ref[...]


@functools.partial(jax.jit, static_argnames=("alpha", "gamma", "logits",
                                             "tile_rows", "num_cores"))
def _focal_loss_impl(inputs, targets, *, alpha, gamma, logits, tile_rows,
                     num_cores):
    total = int(inputs.size)
    x = inputs.reshape(-1)     # free bitcast; keep native dtype
    t = targets.reshape(-1)

    main = (total // LANE) * LANE
    rem = total - main
    parts = []

    if main > 0:
        if rem == 0:
            xm, tm_ = x, t          # zero-copy: reshape below is a bitcast
        else:
            # TODO(synk): this prefix slice still costs one XLA copy of each
            # input; CompilerParams(allow_input_fusion) or a manual-DMA path
            # could remove it in the future.
            xm, tm_ = x[:main], t[:main]
        rows = main // LANE
        xm = xm.reshape(rows, LANE)
        tm_ = tm_.reshape(rows, LANE)

        # Tile rows: multiple of 32 sublanes (safe for f32/bf16/i8 packing),
        # capped at the full row count (full-dim blocks are always legal).
        tr = min(int(tile_rows), rows)
        tr = min(_round_up(tr, 32), rows)
        acc_rows = _SUBLANE if tr % _SUBLANE == 0 else 1

        n_tiles = pl.cdiv(rows, tr)
        # Split across TensorCores only where there really are >=2 (v7x);
        # on 1-TC chips the split would just be a serial loop + phantom tile.
        n_split = num_cores if (num_cores > 1 and n_tiles >= num_cores) else 1
        tiles_per_core = pl.cdiv(n_tiles, n_split)

        kernel = functools.partial(
            _focal_sum_kernel, alpha=float(alpha), gamma=float(gamma),
            logits=bool(logits), rows=rows, tile_rows=tr,
            tiles_per_core=tiles_per_core, acc_rows=acc_rows)

        def in_map(c, i):
            # Clamp so a phantom tile (odd tile count on the 2nd core)
            # re-reads the last real tile instead of indexing OOB; its
            # contribution is zeroed by the in-kernel row mask.
            return (jnp.minimum(c * tiles_per_core + i, n_tiles - 1), 0)

        in_spec = pl.BlockSpec((tr, LANE), in_map)
        # TODO(synk): sweep pipeline_mode=pl.Buffered(3) if profiling ever
        # shows exposed DMA at very small tile counts.

        in_itemsize = xm.dtype.itemsize + tm_.dtype.itemsize
        vmem_limit = int(min(
            56 << 20,
            max(32 << 20,
                2 * tr * LANE * in_itemsize      # double-buffered inputs
                + 8 * tr * LANE * 4              # f32 elementwise temporaries
                + (4 << 20))))
        cost = pl.CostEstimate(
            flops=int(20 * main),
            transcendentals=int(3 * main),
            bytes_accessed=int(main * in_itemsize
                               + n_split * acc_rows * LANE * 4))

        partials = pl.pallas_call(
            kernel,
            out_shape=jax.ShapeDtypeStruct((n_split, acc_rows, LANE),
                                           jnp.float32),
            grid_spec=pltpu.PrefetchScalarGridSpec(
                num_scalar_prefetch=0,
                grid=(n_split, tiles_per_core),
                in_specs=[in_spec, in_spec],
                out_specs=pl.BlockSpec((1, acc_rows, LANE),
                                       lambda c, i: (c, 0, 0)),
                scratch_shapes=[pltpu.VMEM((acc_rows, LANE), jnp.float32)]),
            compiler_params=pltpu.CompilerParams(
                dimension_semantics=("parallel", "arbitrary"),
                vmem_limit_bytes=vmem_limit),
            cost_estimate=cost,
        )(xm, tm_)
        parts.append(jnp.sum(partials))

    if rem > 0:
        # <=127-element tail: tiny fused jnp expression instead of padding /
        # copying both full inputs.
        pr = x[main:].astype(jnp.float32)
        tr_ = t[main:].astype(jnp.float32)
        parts.append(jnp.sum(_focal_from_bce(_bce(pr, tr_, logits),
                                             alpha, gamma)))

    return sum(parts) / total


def focal_loss(inputs, targets, *, alpha=1.0, gamma=0.0, logits=False,
               tile_rows=4096, num_cores=None):
    """Mean focal loss over all elements (matches FocalLoss.forward).

    The L1-regularization term of the reference module is dead code (never
    added to the returned loss) and is therefore omitted.
    """
    if num_cores is None:
        num_cores = _num_tensorcores()
    return _focal_loss_impl(inputs, targets, alpha=float(alpha),
                            gamma=float(gamma), logits=bool(logits),
                            tile_rows=int(tile_rows),
                            num_cores=int(num_cores))


def _ref_focal(inputs, targets, alpha, gamma, logits):
    """Pure-JAX reference (mirrors the PyTorch math)."""
    p = inputs.astype(jnp.float32)
    t = targets.astype(jnp.float32)
    if logits:
        bce = jnp.maximum(p, 0.0) - p * t + jnp.log1p(jnp.exp(-jnp.abs(p)))
    else:
        bce = -(t * jnp.maximum(jnp.log(p), -100.0)
                + (1.0 - t) * jnp.maximum(jnp.log(1.0 - p), -100.0))
    pt = jnp.exp(-bce)
    return jnp.mean(alpha * (1.0 - pt) ** gamma * bce)


if __name__ == "__main__":
    key = jax.random.PRNGKey(0)
    k1, k2, k3, k4, k5, k6 = jax.random.split(key, 6)

    # 1) Small NCHW map, gamma=2, probabilities (logits=False default path).
    B, C, H, W = 2, 4, 16, 16
    probs = jax.nn.sigmoid(jax.random.normal(k1, (B, C, H, W), jnp.float32))
    tgt = (jax.random.uniform(k2, (B, C, H, W)) > 0.5).astype(jnp.float32)
    loss = jax.block_until_ready(focal_loss(probs, tgt, alpha=1.0, gamma=2.0))
    ref = _ref_focal(probs, tgt, 1.0, 2.0, False)
    assert jnp.allclose(loss, ref, rtol=1e-5, atol=1e-6), (loss, ref)

    # 1b) Module defaults (alpha=1, gamma=0) on the same data.
    loss0 = jax.block_until_ready(focal_loss(probs, tgt))
    ref0 = _ref_focal(probs, tgt, 1.0, 0.0, False)
    assert jnp.allclose(loss0, ref0, rtol=1e-5, atol=1e-6), (loss0, ref0)

    # 1c) Native bf16 streaming (no wrapper upcast; kernel upcasts on-chip).
    loss_b = jax.block_until_ready(
        focal_loss(probs.astype(jnp.bfloat16), tgt.astype(jnp.bfloat16),
                   alpha=1.0, gamma=2.0))
    ref_b = _ref_focal(probs.astype(jnp.bfloat16), tgt.astype(jnp.bfloat16),
                       1.0, 2.0, False)
    assert jnp.allclose(loss_b, ref_b, rtol=1e-5, atol=1e-6), (loss_b, ref_b)

    # 2) Logits path, non-integer gamma, total not a multiple of 128
    #    (kernel prefix + <=127-element jnp tail, no padded copies).
    logits_in = jax.random.normal(k3, (2, 3, 7, 5), jnp.float32)
    tgt2 = (jax.random.uniform(k4, (2, 3, 7, 5)) > 0.5).astype(jnp.float32)
    loss2 = jax.block_until_ready(
        focal_loss(logits_in, tgt2, alpha=0.25, gamma=1.5, logits=True))
    ref2 = _ref_focal(logits_in, tgt2, 0.25, 1.5, True)
    assert jnp.allclose(loss2, ref2, rtol=1e-5, atol=1e-6), (loss2, ref2)

    # 3) Multi-tile with a partial last tile; force the 2-way core split so
    #    the phantom-tile (v7x) code path is exercised on any chip.
    probs3 = jax.nn.sigmoid(jax.random.normal(k5, (2, 5, 32, 32), jnp.float32))
    tgt3 = (jax.random.uniform(k6, (2, 5, 32, 32)) > 0.5).astype(jnp.float32)
    loss3 = jax.block_until_ready(
        focal_loss(probs3, tgt3, alpha=1.0, gamma=2.0, tile_rows=32,
                   num_cores=2))
    ref3 = _ref_focal(probs3, tgt3, 1.0, 2.0, False)
    assert jnp.allclose(loss3, ref3, rtol=1e-5, atol=1e-6), (loss3, ref3)

    print("KERNEL_OK")
</pallas_src>

<mosaic_0001>
module attributes {stable_mosaic.version = 11 : i64} {
  func.func @_focal_sum_kernel(%arg0: i32, %arg1: i32, %arg2: memref<16x128xf32, #tpu.memory_space<vmem>>, %arg3: memref<16x128xf32, #tpu.memory_space<vmem>>, %arg4: memref<1x8x128xf32, #tpu.memory_space<vmem>>, %arg5: memref<8x128xf32, #tpu.memory_space<vmem>>) attributes {dimension_semantics = [#tpu.dimension_semantics<parallel>, #tpu.dimension_semantics<arbitrary>], iteration_bounds = array<i64: 1, 1>, scalar_prefetch = 0 : i64, scratch_operands = 1 : i64, tpu.core_type = #tpu.core_type<tc>, window_params = [{transform_indices = @transform_0, window_bounds = array<i64: 16, 128>}, {transform_indices = @transform_1, window_bounds = array<i64: 16, 128>}, {transform_indices = @transform_2, window_bounds = array<i64: 1, 8, 128>}]} {
    %c0_i32 = arith.constant 0 : i32
    %0 = arith.cmpi eq, %arg1, %c0_i32 : i32
    %1 = arith.extui %0 : i1 to i32
    %c0_i32_0 = arith.constant 0 : i32
    %2 = arith.cmpi ne, %1, %c0_i32_0 : i32
    scf.if %2 {
      %cst_17 = arith.constant 0.000000e+00 : f32
      %40 = vector.broadcast %cst_17 : f32 to vector<8x128xf32>
      %c0_18 = arith.constant 0 : index
      %c0_19 = arith.constant 0 : index
      %41 = vector.load %arg5[%c0_18, %c0_19] : memref<8x128xf32, #tpu.memory_space<vmem>>, vector<8x128xf32>
      tpu.vector_store %arg5[%c0_18, %c0_19], %40 {strides = array<i32>} : memref<8x128xf32, #tpu.memory_space<vmem>>, vector<8x128xf32>,
    } else {
    }
    %c0 = arith.constant 0 : index
    %c0_1 = arith.constant 0 : index
    %3 = vector.load %arg2[%c0, %c0_1] : memref<16x128xf32, #tpu.memory_space<vmem>>, vector<16x128xf32>
    %c0_2 = arith.constant 0 : index
    %c0_3 = arith.constant 0 : index
    %4 = vector.load %arg3[%c0_2, %c0_3] : memref<16x128xf32, #tpu.memory_space<vmem>>, vector<16x128xf32>
    %5 = math.log %3 : vector<16x128xf32>
    %cst = arith.constant -1.000000e+02 : f32
    %6 = vector.broadcast %cst : f32 to vector<16x128xf32>
    %7 = arith.maximumf %5, %6 : vector<16x128xf32>
    %cst_4 = arith.constant 1.000000e+00 : f32
    %8 = vector.broadcast %cst_4 : f32 to vector<16x128xf32>
    %9 = arith.subf %8, %3 : vector<16x128xf32>
    %10 = math.log %9 : vector<16x128xf32>
    %cst_5 = arith.constant -1.000000e+02 : f32
    %11 = vector.broadcast %cst_5 : f32 to vector<16x128xf32>
    %12 = arith.maximumf %10, %11 : vector<16x128xf32>
    %13 = arith.mulf %4, %7 : vector<16x128xf32>
    %cst_6 = arith.constant 1.000000e+00 : f32
    %14 = vector.broadcast %cst_6 : f32 to vector<16x128xf32>
    %15 = arith.subf %14, %4 : vector<16x128xf32>
    %16 = arith.mulf %15, %12 : vector<16x128xf32>
    %17 = arith.addf %13, %16 : vector<16x128xf32>
    %cst_7 = arith.constant 0.000000e+00 : f32
    %18 = vector.broadcast %cst_7 : f32 to vector<16x128xf32>
    %19 = arith.subf %18, %17 : vector<16x128xf32>
    %cst_8 = arith.constant 0.000000e+00 : f32
    %20 = vector.broadcast %cst_8 : f32 to vector<16x128xf32>
    %21 = arith.subf %20, %19 : vector<16x128xf32>
    %22 = math.exp %21 : vector<16x128xf32>
    %cst_9 = arith.constant 1.000000e+00 : f32
    %23 = vector.broadcast %cst_9 : f32 to vector<16x128xf32>
    %24 = arith.subf %23, %22 : vector<16x128xf32>
    %25 = arith.mulf %24, %24 : vector<16x128xf32>
    %26 = arith.mulf %25, %19 : vector<16x128xf32>
    %c1_i32 = arith.constant 1 : i32
    %27 = arith.muli %arg0, %c1_i32 : i32
    %28 = arith.addi %27, %arg1 : i32
    %c16_i32 = arith.constant 16 : i32
    %29 = arith.muli %28, %c16_i32 : i32
    %c16_i32_10 = arith.constant 16 : i32
    %30 = arith.subi %c16_i32_10, %29 : i32
    %c16_i32_11 = arith.constant 16 : i32
    %31 = arith.cmpi sge, %30, %c16_i32_11 : i32
    %32 = arith.extui %31 : i1 to i32
    %c0_i32_12 = arith.constant 0 : i32
    %33 = arith.cmpi ne, %32, %c0_i32_12 : i32
    scf.if %33 {
      %c0_17 = arith.constant 0 : index
      %c0_18 = arith.constant 0 : index
      %40 = vector.load %arg5[%c0_17, %c0_18] : memref<8x128xf32, #tpu.memory_space<vmem>>, vector<8x128xf32>
      %41 = vector.shape_cast %26 : vector<16x128xf32> to vector<2x8x128xf32>
      %cst_19 = arith.constant dense<0.000000e+00> : vector<8x128xf32>
      %42 = vector.multi_reduction <add>, %41, %cst_19 [0] : vector<2x8x128xf32> to vector<8x128xf32>
      %43 = arith.addf %40, %42 : vector<8x128xf32>
      %c0_20 = arith.constant 0 : index
      %c0_21 = arith.constant 0 : index
      %44 = vector.load %arg5[%c0_20, %c0_21] : memref<8x128xf32, #tpu.memory_space<vmem>>, vector<8x128xf32>
      tpu.vector_store %arg5[%c0_20, %c0_21], %43 {strides = array<i32>} : memref<8x128xf32, #tpu.memory_space<vmem>>, vector<8x128xf32>,
    } else {
    }
    %c16_i32_13 = arith.constant 16 : i32
    %34 = arith.cmpi slt, %30, %c16_i32_13 : i32
    %35 = arith.extui %34 : i1 to i32
    %c0_i32_14 = arith.constant 0 : i32
    %36 = arith.cmpi ne, %35, %c0_i32_14 : i32
    scf.if %36 {
      %40 = tpu.iota {dimensions = array<i32: 0>} : vector<16x128xi32>
      %41 = vector.broadcast %30 : i32 to vector<16x128xi32>
      %42 = arith.cmpi slt, %40, %41 : vector<16x128xi32>
      %cst_17 = arith.constant 0.000000e+00 : f32
      %43 = vector.broadcast %cst_17 : f32 to vector<16x128xf32>
      %44 = arith.select %42, %26, %43 : vector<16x128xi1>, vector<16x128xf32>
      %c0_18 = arith.constant 0 : index
      %c0_19 = arith.constant 0 : index
      %45 = vector.load %arg5[%c0_18, %c0_19] : memref<8x128xf32, #tpu.memory_space<vmem>>, vector<8x128xf32>
      %46 = vector.shape_cast %44 : vector<16x128xf32> to vector<2x8x128xf32>
      %cst_20 = arith.constant dense<0.000000e+00> : vector<8x128xf32>
      %47 = vector.multi_reduction <add>, %46, %cst_20 [0] : vector<2x8x128xf32> to vector<8x128xf32>
      %48 = arith.addf %45, %47 : vector<8x128xf32>
      %c0_21 = arith.constant 0 : index
      %c0_22 = arith.constant 0 : index
      %49 = vector.load %arg5[%c0_21, %c0_22] : memref<8x128xf32, #tpu.memory_space<vmem>>, vector<8x128xf32>
      tpu.vector_store %arg5[%c0_21, %c0_22], %48 {strides = array<i32>} : memref<8x128xf32, #tpu.memory_space<vmem>>, vector<8x128xf32>,
    } else {
    }
    %c0_i32_15 = arith.constant 0 : i32
    %37 = arith.cmpi eq, %arg1, %c0_i32_15 : i32
    %38 = arith.extui %37 : i1 to i32
    %c0_i32_16 = arith.constant 0 : i32
    %39 = arith.cmpi ne, %38, %c0_i32_16 : i32
    scf.if %39 {
      %c0_17 = arith.constant 0 : index
      %c0_18 = arith.constant 0 : index
      %40 = vector.load %arg5[%c0_17, %c0_18] : memref<8x128xf32, #tpu.memory_space<vmem>>, vector<8x128xf32>
      %c0_19 = arith.constant 0 : index
      %c0_20 = arith.constant 0 : index
      %c0_21 = arith.constant 0 : index
      %41 = vector.load %arg4[%c0_19, %c0_20, %c0_21] : memref<1x8x128xf32, #tpu.memory_space<vmem>>, vector<1x8x128xf32>
      %42 = vector.shape_cast %41 : vector<1x8x128xf32> to vector<8x128xf32>
      %43 = vector.shape_cast %40 : vector<8x128xf32> to vector<1x8x128xf32>
      tpu.vector_store %arg4[%c0_19, %c0_20, %c0_21], %43 {strides = array<i32>} : memref<1x8x128xf32, #tpu.memory_space<vmem>>, vector<1x8x128xf32>,
    } else {
    }
    return
  }
  func.func @transform_0(%arg0: i32, %arg1: i32) -> (i32, i32) {
    %c1_i32 = arith.constant 1 : i32
    %0 = arith.muli %arg0, %c1_i32 : i32
    %1 = arith.addi %0, %arg1 : i32
    %c0_i32 = arith.constant 0 : i32
    %2 = arith.minsi %1, %c0_i32 : i32
    %c0_i32_0 = arith.constant 0 : i32
    %c0_i32_1 = arith.constant 0 : i32
    return %2, %c0_i32_0 : i32, i32
  }
  func.func @transform_1(%arg0: i32, %arg1: i32) -> (i32, i32) {
    %c1_i32 = arith.constant 1 : i32
    %0 = arith.muli %arg0, %c1_i32 : i32
    %1 = arith.addi %0, %arg1 : i32
    %c0_i32 = arith.constant 0 : i32
    %2 = arith.minsi %1, %c0_i32 : i32
    %c0_i32_0 = arith.constant 0 : i32
    %c0_i32_1 = arith.constant 0 : i32
    return %2, %c0_i32_0 : i32, i32
  }
  func.func @transform_2(%arg0: i32, %arg1: i32) -> (i32, i32, i32) {
    %c0_i32 = arith.constant 0 : i32
    %c0_i32_0 = arith.constant 0 : i32
    %c0_i32_1 = arith.constant 0 : i32
    return %arg0, %c0_i32, %c0_i32_0 : i32, i32, i32
  }
}

</mosaic_0001>

<llo_original>
// kernel: _focal_loss_impl.1
$region0: #{_focal_loss_impl.1}
  #allocation0 [shape = 'u32[]', space=smem, size = 0x4, offset = 0x4, fixed_abs, tag = 'smem constant byte address 0x4 - core index']
  #allocation1 [shape = 'u32[144,128]{1,0:T(1,128)}', space=vmem, size = 0x12000, scoped, tag = 'internal scratch']
  #allocation2 [shape = 'f32[8,128]{1,0:T(8,128)}', space=vmem, size = 0x1000, scoped, tag = 'scratch operand']
  %s0 = inlined_call_operand.vmem [shape: f32[16,128], index: 0, kind: input, shape index: {}]
  %s1 = inlined_call_operand.vmem [shape: f32[16,128], index: 1, kind: input, shape index: {}]
  %s2 = inlined_call_operand.vmem [shape: f32[1,8,128], index: 2, kind: output, shape index: {}]
  %s3 = sld [smem:[#allocation0]]
  $region34: #{_focal_loss_impl.1} parent=0
    _
  %s5 = ssub.s32 1, %s3
  %s6 = scalar_select 0, %s5, %s3
  // Predicated region
  $region2: #{_focal_loss_impl.1} parent=0 // pred_check
    _
  $region3: #{_focal_loss_impl.1} parent=0 // pred_check_branch
    %8 = sbr.rel (0) target = $region5
  $region4: #{_focal_loss_impl.1} parent=0 // pred_region
    %s9 = sadd.s32 0, 0
    %p10 = scmp.lt.s32.totalorder %s9, 0
    %s11 = scalar_select %p10, %s9, 0
    %s12 = smul.u32 2, %s11
    %p13 = scmp.lt.s32.totalorder %s12, 1
    %s14 = scalar_select %p13, %s12, 1
    %s15 = smul.addr %s14, 8
    %s16 = scalar_lea.vmem %s0, %s15
    %s17 = sadd.s32 0, 0
    %p18 = scmp.lt.s32.totalorder %s17, 0
    %s19 = scalar_select %p18, %s17, 0
    %s20 = smul.u32 2, %s19
  $region5: #{_focal_loss_impl.1} parent=0 // pred_fallthru
    _
  // Predicated region
  $region6: #{_focal_loss_impl.1} parent=0 // pred_check
    _
  $region7: #{_focal_loss_impl.1} parent=0 // pred_check_branch
    %22 = sbr.rel (0) target = $region9
  $region8: #{_focal_loss_impl.1} parent=0 // pred_region
    %s23 = sadd.s32 0, 0
    %p24 = scmp.lt.s32.totalorder %s23, 0
    %s25 = scalar_select %p24, %s23, 0
    %s26 = smul.u32 2, %s25
    %p27 = scmp.lt.s32.totalorder %s26, 1
    %s28 = scalar_select %p27, %s26, 1
    %s29 = smul.addr %s28, 8
    %s30 = scalar_lea.vmem %s1, %s29
    %s31 = sadd.s32 0, 0
    %p32 = scmp.lt.s32.totalorder %s31, 0
    %s33 = scalar_select %p32, %s31, 0
    %s34 = smul.u32 2, %s33
  $region9: #{_focal_loss_impl.1} parent=0 // pred_fallthru
    _
  %s35 = sadd.s32 0, 0
  %p36 = scmp.lt.s32.totalorder %s35, 0
  %s37 = scalar_select %p36, %s35, 0
  %s38 = smul.u32 2, %s37
  %p39 = scmp.lt.s32.totalorder %s38, 1
  %s40 = scalar_select %p39, %s38, 1
  %s41 = smul.addr %s40, 8
  %s42 = scalar_lea.vmem %s0, %s41
  %s43 = sadd.s32 0, 0
  %p44 = scmp.lt.s32.totalorder %s43, 0
  %s45 = scalar_select %p44, %s43, 0
  %s46 = smul.u32 2, %s45
  %p47 = scmp.lt.s32.totalorder %s46, 1
  %s48 = scalar_select %p47, %s46, 1
  %s49 = smul.addr %s48, 8
  %s50 = scalar_lea.vmem %s1, %s49
  %s51 = sadd.s32 0, 0
  %p52 = scmp.lt.s32.totalorder %s51, 0
  %s53 = scalar_select %p52, %s51, 0
  %s54 = smul.u32 2, %s53
  %p55 = scmp.lt.s32.totalorder %s54, 1
  %s56 = scalar_select %p55, %s54, 1
  %s57 = smul.addr %s56, 8
  %s58 = scalar_lea.vmem %s0, %s57
  %s59 = sadd.s32 0, 0
  %p60 = scmp.lt.s32.totalorder %s59, 0
  %s61 = scalar_select %p60, %s59, 0
  %s62 = smul.u32 2, %s61
  %s63 = sadd.s32 0, 0
  %p64 = scmp.lt.s32.totalorder %s63, 0
  %s65 = scalar_select %p64, %s63, 0
  %s66 = smul.u32 2, %s65
  %p67 = scmp.lt.s32.totalorder %s66, 1
  %s68 = scalar_select %p67, %s66, 1
  %s69 = smul.addr %s68, 8
  %s70 = scalar_lea.vmem %s1, %s69
  %s71 = sadd.s32 0, 0
  %p72 = scmp.lt.s32.totalorder %s71, 0
  %s73 = scalar_select %p72, %s71, 0
  %s74 = smul.u32 2, %s73
  %p75 = scmp.eq.s32.totalorder 0, 0
  // Predicated region
  $region10: #{_focal_loss_impl.1} parent=0 // pred_check
    %p76 = pneg %p75
  $region11: #{_focal_loss_impl.1} parent=0 // pred_check_branch
    %78 = sbr.rel (%p76) target = $region13
  $region12: #{_focal_loss_impl.1} parent=0 // pred_region
    %79 = vst [vmem:[#allocation2] sm:$0xff] 0.0
  $region13: #{_focal_loss_impl.1} parent=0 // pred_fallthru
    _
  %v80 = vld [vmem:[%s58] sm:$0xff]
  %v81 = vld [vmem:[%s58 + $0x8] sm:$0xff]
  %v82 = vld [vmem:[%s70] sm:$0xff]
  %v83 = vld [vmem:[%s70 + $0x8] sm:$0xff]
  %v84 = vlog2.pop %v80
  %v85 = vmul.f32 %v84, 0.6931472
  %v86 = vlog2.pop %v81
  %v87 = vmul.f32 %v86, 0.6931472
  %v88 = vmax.f32 %v85, -100.0
  %v89 = vmax.f32 %v87, -100.0
  %v90 = vsub.f32 1.0, %v80
  %v91 = vsub.f32 1.0, %v81
  %v92 = vlog2.pop %v90
  %v93 = vmul.f32 %v92, 0.6931472
  %v94 = vlog2.pop %v91
  %v95 = vmul.f32 %v94, 0.6931472
  %v96 = vmax.f32 %v93, -100.0
  %v97 = vmax.f32 %v95, -100.0
  %v98 = vmul.f32 %v82, %v88
  %v99 = vmul.f32 %v83, %v89
  %v100 = vsub.f32 1.0, %v82
  %v101 = vsub.f32 1.0, %v83
  %v102 = vmul.f32 %v100, %v96
  %v103 = vmul.f32 %v101, %v97
  %v104 = vadd.f32 %v98, %v102
  %v105 = vadd.f32 %v99, %v103
  %v106 = vsub.f32 0.0, %v104
  %v107 = vsub.f32 0.0, %v105
  %v108 = vsub.f32 0.0, %v106
  %v109 = vsub.f32 0.0, %v107
  %v110 = vmul.f32 %v108, 1.442695
  %v111 = vpow.pop %v110
  %v112 = vmul.f32 %v109, 1.442695
  %v113 = vpow.pop %v112
  %v114 = vsub.f32 1.0, %v111
  %v115 = vsub.f32 1.0, %v113
  %v116 = vmul.f32 %v114, %v114
  %v117 = vmul.f32 %v115, %v115
  %v118 = vmul.f32 %v116, %v106
  %v119 = vmul.f32 %v117, %v107
  %s120 = sadd.s32 0, 0
  %s121 = smul.u32 %s120, 16
  %s122 = ssub.s32 16, %s121
  %p123 = scmp.ge.s32.totalorder %s122, 16
  // Predicated region
  $region14: #{_focal_loss_impl.1} parent=0 // pred_check
    %p124 = pneg %p123
  $region15: #{_focal_loss_impl.1} parent=0 // pred_check_branch
    %126 = sbr.rel (%p124) target = $region17
  $region16: #{_focal_loss_impl.1} parent=0 // pred_region
    %v127 = vld [vmem:[#allocation2] sm:$0xff]
    %v128 = vadd.f32 %v118, %v119
    %v129 = vadd.f32 %v127, %v128
    %130 = vst [vmem:[#allocation2] sm:$0xff] %v129
  $region17: #{_focal_loss_impl.1} parent=0 // pred_fallthru
    _
  %p131 = scmp.lt.s32.totalorder %s122, 16
  // Predicated region
  $region18: #{_focal_loss_impl.1} parent=0 // pred_check
    %p132 = pneg %p131
  $region19: #{_focal_loss_impl.1} parent=0 // pred_check_branch
    %134 = sbr.rel (%p132) target = $region21
  $region20: #{_focal_loss_impl.1} parent=0 // pred_region
    %v135 = vlaneseq
    %v136 = vshrl.u32 %v135, 7
    %v137 = vadd.s32 %v136, 8
    %v138 = vstv %s122
    %vm139 = vcmp.lt.s32.totalorder %v136, %v138
    %vm140 = vcmp.lt.s32.totalorder %v137, %v138
    %v141 = vsel %vm139, %v118, 0.0
    %v142 = vsel %vm140, %v119, 0.0
    %v143 = vld [vmem:[#allocation2] sm:$0xff]
    %v144 = vadd.f32 %v141, %v142
    %v145 = vadd.f32 %v143, %v144
    %146 = vst [vmem:[#allocation2] sm:$0xff] %v145
  $region21: #{_focal_loss_impl.1} parent=0 // pred_fallthru
    _
  // Predicated region
  $region22: #{_focal_loss_impl.1} parent=0 // pred_check
    %p147 = pneg %p75
  $region23: #{_focal_loss_impl.1} parent=0 // pred_check_branch
    %149 = sbr.rel (%p147) target = $region25
  $region24: #{_focal_loss_impl.1} parent=0 // pred_region
    %v150 = vld [vmem:[#allocation2] sm:$0xff]
    %151 = vst [vmem:[%s2] sm:$0xff] %v150
  $region25: #{_focal_loss_impl.1} parent=0 // pred_fallthru
    _
  // Predicated region
  $region26: #{_focal_loss_impl.1} parent=0 // pred_check
    _
  $region27: #{_focal_loss_impl.1} parent=0 // pred_check_branch
    %153 = sbr.rel (0) target = $region29
  $region28: #{_focal_loss_impl.1} parent=0 // pred_region
    _
  $region29: #{_focal_loss_impl.1} parent=0 // pred_fallthru
    _
  // Predicated region
  $region30: #{_focal_loss_impl.1} parent=0 // pred_check
    _
  $region31: #{_focal_loss_impl.1} parent=0 // pred_check_branch
    %155 = sbr.rel (0) target = $region33
  $region32: #{_focal_loss_impl.1} parent=0 // pred_region
    _
  $region33: #{_focal_loss_impl.1} parent=0 // pred_fallthru
    _

</llo_original>
